<compile_context>
chip_gen: v7x
topology: tpu7x:2x2x1
jax: 0.10.0
libtpu: 0.0.40
codegen_flags: <defaults>
</compile_context>

<pallas_src>
import functools

import jax
import jax.numpy as jnp
from jax.experimental import pallas as pl
from jax.experimental.pallas import tpu as pltpu


LANE = 128  # TPU lane width: feature padding and A tiles align to it.


def _round_up(x, m):
    return (x + m - 1) // m * m


def _pow2_tile(limit):
    """Largest power-of-two multiple of LANE that is <= limit (at least LANE)."""
    t = LANE
    while t * 2 <= limit:
        t *= 2
    return t


def _choose_tiles(n_pad0, tm_target, tk_target):
    """Pick (tm, tk, n_pad): pow2*128 tiles, >=2 row tiles when possible,
    and pad N up to the tile rather than shrinking tiles to divide N."""
    tm_cap = n_pad0 // 2 if n_pad0 >= 2 * LANE else LANE
    tm = _pow2_tile(max(LANE, min(tm_target, tm_cap)))
    tk = _pow2_tile(max(LANE, min(tk_target, n_pad0)))
    # Shrink tk only if padding N up to it would cost more than ~12% extra rows
    # (A traffic scales quadratically with n_pad, so keep padding bounded).
    while tk > LANE and _round_up(n_pad0, max(tm, tk)) > n_pad0 + n_pad0 // 8:
        tk //= 2
    n_pad = _round_up(n_pad0, max(tm, tk))
    return tm, tk, n_pad


# ----------------------------------------------------------------------------
# Fused GCN layer kernel:  out = [relu](dinv * ((A+I) @ Z) + b) [@ W_next]
#   * A streamed as (tm, tk) bf16 tiles over a (row, reduction) grid
#   * Z fully VMEM-resident (already pre-scaled by D^{-1/2} on its rows)
#   * f32 accumulator with pl.when init / finalize
#   * finalize applies the left D^{-1/2}, bias, relu and (optionally) the next
#     layer's projection plus its D^{-1/2} pre-scale, all in one pass.
# ----------------------------------------------------------------------------
def _layer_kernel(*refs, apply_relu, project):
    if project:
        a_ref, z_ref, b_ref, dinv_ref, w_ref, o_ref, acc_ref = refs
    else:
        a_ref, z_ref, b_ref, dinv_ref, o_ref, acc_ref = refs
        w_ref = None

    k = pl.program_id(1)
    tk = a_ref.shape[1]

    @pl.when(k == 0)
    def _():
        acc_ref[...] = jnp.zeros_like(acc_ref)

    start = pl.multiple_of(k * tk, tk)
    z_tile = z_ref[pl.ds(start, tk), :]           # slice resident Z (no HBM re-read)
    acc_ref[...] += jnp.dot(a_ref[...], z_tile,
                            preferred_element_type=jnp.float32)

    @pl.when(k == pl.num_programs(1) - 1)
    def _():
        dinv = dinv_ref[...]                      # (tm, 1) f32 left D^{-1/2}
        h = dinv * acc_ref[...] + b_ref[...]      # f32 epilogue (v5e-safe)
        if apply_relu:
            h = jnp.maximum(h, 0.0)
        if project:
            # Next layer's projection + its D^{-1/2} row pre-scale, fused.
            zn = (dinv * h).astype(jnp.bfloat16)
            o_ref[...] = jnp.dot(zn, w_ref[...],
                                 preferred_element_type=jnp.float32
                                 ).astype(o_ref.dtype)
        else:
            o_ref[...] = h.astype(o_ref.dtype)


def _gcn_layer(a_bf16, z_bf16, bias, dinv, w_next, *, apply_relu, out_dtype,
               tm, tk, vmem_limit):
    n_pad = a_bf16.shape[0]
    c_pad = z_bf16.shape[1]
    project = w_next is not None
    grid = (n_pad // tm, n_pad // tk)

    in_specs = [
        pl.BlockSpec((tm, tk), lambda i, k: (i, k)),         # A tile (streamed)
        pl.BlockSpec((n_pad, c_pad), lambda i, k: (0, 0)),   # Z resident in VMEM
        pl.BlockSpec((1, c_pad), lambda i, k: (0, 0)),       # bias resident
        pl.BlockSpec((tm, 1), lambda i, k: (i, 0)),          # dinv row tile
    ]
    args = [a_bf16, z_bf16, bias, dinv]
    if project:
        in_specs.append(pl.BlockSpec((c_pad, c_pad), lambda i, k: (0, 0)))
        args.append(w_next)                                   # W_next resident

    kernel = functools.partial(_layer_kernel, apply_relu=apply_relu,
                               project=project)
    return pl.pallas_call(
        kernel,
        out_shape=jax.ShapeDtypeStruct((n_pad, c_pad), out_dtype),
        grid_spec=pltpu.PrefetchScalarGridSpec(
            num_scalar_prefetch=0,
            grid=grid,
            in_specs=in_specs,
            out_specs=pl.BlockSpec((tm, c_pad), lambda i, k: (i, 0)),
            scratch_shapes=[pltpu.VMEM((tm, c_pad), jnp.float32)],
        ),
        compiler_params=pltpu.CompilerParams(
            dimension_semantics=("parallel", "arbitrary"),
            vmem_limit_bytes=vmem_limit,
        ),
    )(*args)


# ----------------------------------------------------------------------------
# Graph preprocessing (plain XLA: scatter / one-hot have no clean Pallas path)
# ----------------------------------------------------------------------------
def _build_adj_and_dinv(edge_index, num_nodes, n_pad):
    """Exact 0/1 bf16 (A + I) at padded size, plus f32 D^{-1/2} column vector."""
    src, dst = edge_index[0], edge_index[1]
    loops = jnp.arange(num_nodes, dtype=src.dtype)
    s = jnp.concatenate([src, loops])
    d = jnp.concatenate([dst, loops])
    adj = jnp.zeros((n_pad, n_pad), jnp.bfloat16).at[d, s].add(
        jnp.ones(s.shape, jnp.bfloat16))
    deg = jnp.zeros((n_pad,), jnp.float32).at[d].add(1.0)
    dinv = jnp.where(deg > 0, jax.lax.rsqrt(deg), 0.0)
    return adj, dinv[:, None]


def _build_pool_matrix(batch, num_graphs):
    onehot = (batch[None, :] == jnp.arange(num_graphs)[:, None]).astype(jnp.float32)
    counts = onehot.sum(axis=1, keepdims=True)
    return onehot / jnp.maximum(counts, 1.0)


# ----------------------------------------------------------------------------
# Forward
# ----------------------------------------------------------------------------
def gcn_forward(x, edge_index, batch, params, num_graphs,
                *, tm_target=512, tk_target=1024):
    w1, b1, w2, b2, w3, b3, wl, bl = params
    num_nodes = x.shape[0]
    hidden = w1.shape[1]

    c_pad = _round_up(hidden, LANE)
    n_pad0 = _round_up(num_nodes, LANE)
    tm, tk, n_pad = _choose_tiles(n_pad0, tm_target, tk_target)

    # VMEM budget: resident Z (x2 buffers, conservative), double-buffered A
    # tiles, out tiles, f32 accumulator, resident W. Clamp to v7x's 64 MiB/TC.
    vmem_need = (2 * n_pad * c_pad * 2 + 2 * tm * tk * 2 + 2 * tm * c_pad * 2
                 + tm * c_pad * 4 + 2 * c_pad * c_pad * 2 + (1 << 20))
    vmem_limit = int(min(max(32 * 1024 * 1024, vmem_need), 64 * 1024 * 1024))

    # Exact bf16 (A + I); D^{-1/2} kept separately in f32 (no NxN f32 matrix).
    # Padded rows/cols are all-zero and dinv=0, so ghost nodes never leak.
    a_bf16, dinv = _build_adj_and_dinv(edge_index, num_nodes, n_pad)

    # Zero-pad weights / biases to 128 feature lanes.
    def pad_cols(w):
        return jnp.pad(w, ((0, 0), (0, c_pad - w.shape[1])))

    def pad_rows(w):
        return jnp.pad(w, ((0, c_pad - w.shape[0]), (0, 0)))

    w1p = pad_cols(w1)                                   # [F, c_pad] f32 (tiny K)
    w2p = pad_cols(pad_rows(w2)).astype(jnp.bfloat16)    # [c_pad, c_pad]
    w3p = pad_cols(pad_rows(w3)).astype(jnp.bfloat16)
    wlp = pad_rows(wl)                                   # [c_pad, classes]
    b1p = jnp.pad(b1, (0, c_pad - hidden))[None, :]
    b2p = jnp.pad(b2, (0, c_pad - hidden))[None, :]
    b3p = jnp.pad(b3, (0, c_pad - hidden))[None, :]

    # conv1 projection (K = num_node_features, tiny) stays in XLA; pre-scale
    # rows by D^{-1/2} so the Pallas layers only ever stream the exact (A+I).
    xp = jnp.pad(x, ((0, n_pad - num_nodes), (0, 0)))
    z1 = (dinv * jnp.dot(xp, w1p, preferred_element_type=jnp.float32)
          ).astype(jnp.bfloat16)

    # Layer 1: z2 = D^{-1/2} relu(Ahat z1 + b1) W2   (aggregate + fused proj)
    z2 = _gcn_layer(a_bf16, z1, b1p, dinv, w2p, apply_relu=True,
                    out_dtype=jnp.bfloat16, tm=tm, tk=tk, vmem_limit=vmem_limit)
    # Layer 2: z3 = D^{-1/2} relu(Ahat (H1 W2) + b2) W3
    z3 = _gcn_layer(a_bf16, z2, b2p, dinv, w3p, apply_relu=True,
                    out_dtype=jnp.bfloat16, tm=tm, tk=tk, vmem_limit=vmem_limit)
    # Layer 3: h3 = Ahat (H2 W3) + b3   (no relu, no projection), bf16 writeback
    h3 = _gcn_layer(a_bf16, z3, b3p, dinv, None, apply_relu=False,
                    out_dtype=jnp.bfloat16, tm=tm, tk=tk, vmem_limit=vmem_limit)

    # global_mean_pool + dropout(eval identity) + Linear: [G, C]/[G, classes]
    # outputs (classes=3 -> masked partial stores), keep in XLA.
    pool = _build_pool_matrix(batch, num_graphs)
    pool = jnp.pad(pool, ((0, 0), (0, n_pad - num_nodes)))
    pooled = pool @ h3.astype(jnp.float32)
    # TODO(synk): F.dropout(p=0.2, training=True) not applied (eval-mode only).
    return pooled @ wlp + bl[None, :]


def gcn_reference(x, edge_index, batch, params, num_graphs):
    """Pure-JAX f32 reference of the same forward (eval-mode dropout)."""
    num_nodes = x.shape[0]
    src, dst = edge_index[0], edge_index[1]
    adj = jnp.zeros((num_nodes, num_nodes), jnp.float32).at[dst, src].add(1.0)
    adj = adj + jnp.eye(num_nodes, dtype=jnp.float32)
    deg = adj.sum(axis=1)
    dinv = jnp.where(deg > 0, jax.lax.rsqrt(deg), 0.0)
    a_hat = adj * dinv[:, None] * dinv[None, :]
    pool = _build_pool_matrix(batch, num_graphs)
    w1, b1, w2, b2, w3, b3, wl, bl = params
    h = jnp.maximum(a_hat @ (x @ w1) + b1, 0.0)
    h = jnp.maximum(a_hat @ (h @ w2) + b2, 0.0)
    h = a_hat @ (h @ w3) + b3
    pooled = pool @ h
    return pooled @ wl + bl


def init_params(key, num_node_features, hidden_channels, num_classes):
    ks = jax.random.split(key, 8)

    def w(k, fan_in, fan_out):
        return (jax.random.normal(k, (fan_in, fan_out), jnp.float32)
                / jnp.sqrt(jnp.float32(fan_in)))

    w1 = w(ks[0], num_node_features, hidden_channels)
    b1 = 0.01 * jax.random.normal(ks[1], (hidden_channels,), jnp.float32)
    w2 = w(ks[2], hidden_channels, hidden_channels)
    b2 = 0.01 * jax.random.normal(ks[3], (hidden_channels,), jnp.float32)
    w3 = w(ks[4], hidden_channels, hidden_channels)
    b3 = 0.01 * jax.random.normal(ks[5], (hidden_channels,), jnp.float32)
    wl = w(ks[6], hidden_channels, num_classes)
    bl = 0.01 * jax.random.normal(ks[7], (num_classes,), jnp.float32)
    return (w1, b1, w2, b2, w3, b3, wl, bl)


if __name__ == "__main__":
    num_node_features = 4
    hidden_channels = 32
    num_classes = 3

    key = jax.random.PRNGKey(0)
    k_x, k_p, k_x2, k_s, k_d, k_x3, k_s3, k_d3 = jax.random.split(key, 8)
    params = init_params(k_p, num_node_features, hidden_channels, num_classes)

    # --- Case 1: tiny batch of 2 ring graphs (4 nodes each), grid = (1, 1) ---
    num_nodes = 8
    num_graphs = 2
    x = jax.random.normal(k_x, (num_nodes, num_node_features), jnp.float32)
    src = jnp.array([0, 1, 1, 2, 2, 3, 3, 0, 4, 5, 5, 6, 6, 7, 7, 4], jnp.int32)
    dst = jnp.array([1, 0, 2, 1, 3, 2, 0, 3, 5, 4, 6, 5, 7, 6, 4, 7], jnp.int32)
    edge_index = jnp.stack([src, dst], axis=0)
    batch = jnp.array([0, 0, 0, 0, 1, 1, 1, 1], jnp.int32)

    out = gcn_forward(x, edge_index, batch, params, num_graphs)
    out = jax.block_until_ready(out)
    ref = gcn_reference(x, edge_index, batch, params, num_graphs)
    assert out.shape == (num_graphs, num_classes)
    assert jnp.allclose(out, ref, atol=5e-2, rtol=5e-2), "case1 mismatch"

    # --- Case 2: 256-node random graph -> 2 row tiles (both TCs get work) ---
    num_nodes2 = 256
    num_graphs2 = 4
    num_edges2 = 1024
    x2 = jax.random.normal(k_x2, (num_nodes2, num_node_features), jnp.float32)
    src2 = jax.random.randint(k_s, (num_edges2,), 0, num_nodes2, jnp.int32)
    dst2 = jax.random.randint(k_d, (num_edges2,), 0, num_nodes2, jnp.int32)
    edge_index2 = jnp.stack([src2, dst2], axis=0)
    batch2 = (jnp.arange(num_nodes2, dtype=jnp.int32)
              // (num_nodes2 // num_graphs2))

    out2 = gcn_forward(x2, edge_index2, batch2, params, num_graphs2)
    out2 = jax.block_until_ready(out2)
    ref2 = gcn_reference(x2, edge_index2, batch2, params, num_graphs2)
    assert out2.shape == (num_graphs2, num_classes)
    assert jnp.allclose(out2, ref2, atol=5e-2, rtol=5e-2), "case2 mismatch"

    # --- Case 3: 384-node graph -> multi-tile reduction axis (accumulator) ---
    num_nodes3 = 384
    num_graphs3 = 3
    num_edges3 = 2048
    x3 = jax.random.normal(k_x3, (num_nodes3, num_node_features), jnp.float32)
    src3 = jax.random.randint(k_s3, (num_edges3,), 0, num_nodes3, jnp.int32)
    dst3 = jax.random.randint(k_d3, (num_edges3,), 0, num_nodes3, jnp.int32)
    edge_index3 = jnp.stack([src3, dst3], axis=0)
    batch3 = (jnp.arange(num_nodes3, dtype=jnp.int32)
              // (num_nodes3 // num_graphs3))

    out3 = gcn_forward(x3, edge_index3, batch3, params, num_graphs3)
    out3 = jax.block_until_ready(out3)
    ref3 = gcn_reference(x3, edge_index3, batch3, params, num_graphs3)
    assert out3.shape == (num_graphs3, num_classes)
    assert jnp.allclose(out3, ref3, atol=5e-2, rtol=5e-2), "case3 mismatch"

    print("KERNEL_OK")
</pallas_src>

<mosaic_0001>
module attributes {stable_mosaic.version = 11 : i64} {
  func.func @_layer_kernel(%arg0: i32, %arg1: i32, %arg2: memref<128x128xbf16, #tpu.memory_space<vmem>>, %arg3: memref<128x128xbf16, #tpu.memory_space<vmem>>, %arg4: memref<1x128xf32, #tpu.memory_space<vmem>>, %arg5: memref<128x1xf32, #tpu.memory_space<vmem>>, %arg6: memref<128x128xbf16, #tpu.memory_space<vmem>>, %arg7: memref<128x128xbf16, #tpu.memory_space<vmem>>, %arg8: memref<128x128xf32, #tpu.memory_space<vmem>>) attributes {dimension_semantics = [#tpu.dimension_semantics<parallel>, #tpu.dimension_semantics<arbitrary>], iteration_bounds = array<i64: 1, 1>, scalar_prefetch = 0 : i64, scratch_operands = 1 : i64, tpu.core_type = #tpu.core_type<tc>, window_params = [{transform_indices = @transform_0, window_bounds = array<i64: 128, 128>}, {pipeline_mode = #tpu.pipeline_mode<synchronous>, transform_indices = @transform_1, window_bounds = array<i64: 128, 128>}, {pipeline_mode = #tpu.pipeline_mode<synchronous>, transform_indices = @transform_2, window_bounds = array<i64: 1, 128>}, {transform_indices = @transform_3, window_bounds = array<i64: 128, 1>}, {pipeline_mode = #tpu.pipeline_mode<synchronous>, transform_indices = @transform_4, window_bounds = array<i64: 128, 128>}, {transform_indices = @transform_5, window_bounds = array<i64: 128, 128>}]} {
    %c0_i32 = arith.constant 0 : i32
    %0 = arith.cmpi eq, %arg1, %c0_i32 : i32
    %1 = arith.extui %0 : i1 to i32
    %c0_i32_0 = arith.constant 0 : i32
    %2 = arith.cmpi ne, %1, %c0_i32_0 : i32
    scf.if %2 {
      %cst_9 = arith.constant 0.000000e+00 : f32
      %15 = vector.broadcast %cst_9 : f32 to vector<128x128xf32>
      %c0_10 = arith.constant 0 : index
      %c0_11 = arith.constant 0 : index
      %16 = vector.load %arg8[%c0_10, %c0_11] : memref<128x128xf32, #tpu.memory_space<vmem>>, vector<128x128xf32>
      tpu.vector_store %arg8[%c0_10, %c0_11], %15 {strides = array<i32>} : memref<128x128xf32, #tpu.memory_space<vmem>>, vector<128x128xf32>,
    } else {
    }
    %c128_i32 = arith.constant 128 : i32
    %3 = arith.muli %arg1, %c128_i32 : i32
    %4 = tpu.assume_multiple %3, 128 : i32
    %5 = arith.index_cast %4 : i32 to index
    %c0 = arith.constant 0 : index
    %6 = vector.load %arg3[%5, %c0] : memref<128x128xbf16, #tpu.memory_space<vmem>>, vector<128x128xbf16>
    %c0_1 = arith.constant 0 : index
    %c0_2 = arith.constant 0 : index
    %7 = vector.load %arg8[%c0_1, %c0_2] : memref<128x128xf32, #tpu.memory_space<vmem>>, vector<128x128xf32>
    %c0_3 = arith.constant 0 : index
    %c0_4 = arith.constant 0 : index
    %8 = vector.load %arg2[%c0_3, %c0_4] : memref<128x128xbf16, #tpu.memory_space<vmem>>, vector<128x128xbf16>
    %cst = arith.constant dense<0.000000e+00> : vector<128x128xf32>
    %9 = tpu.matmul %8, %6, %cst {dimension_numbers = #tpu.dot_dimension_numbers<[1], [0], [0], [1], [0, 0, 1, 1], [], []>} : vector<128x128xbf16>, vector<128x128xbf16>, vector<128x128xf32> -> vector<128x128xf32>
    %10 = arith.addf %7, %9 : vector<128x128xf32>
    %c0_5 = arith.constant 0 : index
    %c0_6 = arith.constant 0 : index
    %11 = vector.load %arg8[%c0_5, %c0_6] : memref<128x128xf32, #tpu.memory_space<vmem>>, vector<128x128xf32>
    tpu.vector_store %arg8[%c0_5, %c0_6], %10 {strides = array<i32>} : memref<128x128xf32, #tpu.memory_space<vmem>>, vector<128x128xf32>,
    %c0_i32_7 = arith.constant 0 : i32
    %12 = arith.cmpi eq, %arg1, %c0_i32_7 : i32
    %13 = arith.extui %12 : i1 to i32
    %c0_i32_8 = arith.constant 0 : i32
    %14 = arith.cmpi ne, %13, %c0_i32_8 : i32
    scf.if %14 {
      %c0_9 = arith.constant 0 : index
      %c0_10 = arith.constant 0 : index
      %15 = vector.load %arg5[%c0_9, %c0_10] : memref<128x1xf32, #tpu.memory_space<vmem>>, vector<128x1xf32>
      %c0_11 = arith.constant 0 : index
      %c0_12 = arith.constant 0 : index
      %16 = vector.load %arg8[%c0_11, %c0_12] : memref<128x128xf32, #tpu.memory_space<vmem>>, vector<128x128xf32>
      %17 = vector.broadcast %15 : vector<128x1xf32> to vector<128x128xf32>
      %18 = arith.mulf %17, %16 : vector<128x128xf32>
      %c0_13 = arith.constant 0 : index
      %c0_14 = arith.constant 0 : index
      %19 = vector.load %arg4[%c0_13, %c0_14] : memref<1x128xf32, #tpu.memory_space<vmem>>, vector<1x128xf32>
      %20 = vector.broadcast %19 : vector<1x128xf32> to vector<128x128xf32>
      %21 = arith.addf %18, %20 : vector<128x128xf32>
      %cst_15 = arith.constant 0.000000e+00 : f32
      %22 = vector.broadcast %cst_15 : f32 to vector<128x128xf32>
      %23 = arith.maximumf %21, %22 : vector<128x128xf32>
      %24 = vector.broadcast %15 : vector<128x1xf32> to vector<128x128xf32>
      %25 = arith.mulf %24, %23 : vector<128x128xf32>
      %26 = arith.truncf %25 : vector<128x128xf32> to vector<128x128xbf16>
      %c0_16 = arith.constant 0 : index
      %c0_17 = arith.constant 0 : index
      %27 = vector.load %arg6[%c0_16, %c0_17] : memref<128x128xbf16, #tpu.memory_space<vmem>>, vector<128x128xbf16>
      %cst_18 = arith.constant dense<0.000000e+00> : vector<128x128xf32>
      %28 = tpu.matmul %26, %27, %cst_18 {dimension_numbers = #tpu.dot_dimension_numbers<[1], [0], [0], [1], [0, 0, 1, 1], [], []>} : vector<128x128xbf16>, vector<128x128xbf16>, vector<128x128xf32> -> vector<128x128xf32>
      %29 = arith.truncf %28 : vector<128x128xf32> to vector<128x128xbf16>
      %c0_19 = arith.constant 0 : index
      %c0_20 = arith.constant 0 : index
      %30 = vector.load %arg7[%c0_19, %c0_20] : memref<128x128xbf16, #tpu.memory_space<vmem>>, vector<128x128xbf16>
      tpu.vector_store %arg7[%c0_19, %c0_20], %29 {strides = array<i32>} : memref<128x128xbf16, #tpu.memory_space<vmem>>, vector<128x128xbf16>,
    } else {
    }
    return
  }
  func.func @transform_0(%arg0: i32, %arg1: i32) -> (i32, i32) {
    %c0_i32 = arith.constant 0 : i32
    return %arg0, %arg1 : i32, i32
  }
  func.func @transform_1(%arg0: i32, %arg1: i32) -> (i32, i32) {
    %c0_i32 = arith.constant 0 : i32
    %c0_i32_0 = arith.constant 0 : i32
    %c0_i32_1 = arith.constant 0 : i32
    return %c0_i32, %c0_i32_0 : i32, i32
  }
  func.func @transform_2(%arg0: i32, %arg1: i32) -> (i32, i32) {
    %c0_i32 = arith.constant 0 : i32
    %c0_i32_0 = arith.constant 0 : i32
    %c0_i32_1 = arith.constant 0 : i32
    return %c0_i32, %c0_i32_0 : i32, i32
  }
  func.func @transform_3(%arg0: i32, %arg1: i32) -> (i32, i32) {
    %c0_i32 = arith.constant 0 : i32
    %c0_i32_0 = arith.constant 0 : i32
    return %arg0, %c0_i32 : i32, i32
  }
  func.func @transform_4(%arg0: i32, %arg1: i32) -> (i32, i32) {
    %c0_i32 = arith.constant 0 : i32
    %c0_i32_0 = arith.constant 0 : i32
    %c0_i32_1 = arith.constant 0 : i32
    return %c0_i32, %c0_i32_0 : i32, i32
  }
  func.func @transform_5(%arg0: i32, %arg1: i32) -> (i32, i32) {
    %c0_i32 = arith.constant 0 : i32
    %c0_i32_0 = arith.constant 0 : i32
    return %arg0, %c0_i32 : i32, i32
  }
}

</mosaic_0001>

<llo_original>
// kernel: tpu_custom_call.1
$region0: #{tpu_custom_call.1}
  #allocation0 [shape = 'u32[]', space=smem, size = 0x4, offset = 0x4, fixed_abs, tag = 'smem constant byte address 0x4 - core index']
  #allocation1 [shape = 'u32[144,128]{1,0:T(1,128)}', space=vmem, size = 0x12000, scoped, tag = 'internal scratch']
  #allocation2 [shape = 'f32[128,128]{1,0:T(8,128)}', space=vmem, size = 0x10000, scoped, tag = 'scratch operand']
  %s0 = inlined_call_operand.vmem [shape: bf16[128,128], index: 0, kind: input, shape index: {}]
  %s1 = inlined_call_operand.vmem [shape: bf16[128,128], index: 1, kind: input, shape index: {}]
  %s2 = inlined_call_operand.vmem [shape: f32[1,128], index: 2, kind: input, shape index: {}]
  %s3 = inlined_call_operand.vmem [shape: f32[128,1], index: 3, kind: input, shape index: {}]
  %s4 = inlined_call_operand.hbm [shape: bf16[128,128], index: 4, kind: input, shape index: {}]
  %s5 = inlined_call_operand.hbm [shape: bf16[128,128], index: 5, kind: output, shape index: {}]
  %s6 = sld [smem:[#allocation0]]
  $region42: #{tpu_custom_call.1} parent=0
    _
  %s8 = ssub.s32 1, %s6
  %s9 = scalar_select 0, %s8, %s6
  $region1: #{tpu_custom_call.1} parent=0
    #allocation3 [shape = 'u8[32768]{0}', space=vmem, size = 0x8000, scoped, tag = 'input window, operand 4, single buffered']
    #allocation4 [shape = 's32[1]{0}', space=sflag, size = 0x4, scoped, tag = 'scoped memory for tpu_custom_call.1']
    #allocation5 [shape = 's32[1]{0}', space=sflag, size = 0x4, scoped, tag = 'scoped memory for tpu_custom_call.1']
    #allocation6 [shape = 'u8[32768]{0}', space=vmem, size = 0x8000, scoped, tag = 'output window, operand 0, single buffered']
    %10 = vsyncpa [#allocation4], 0
    %11 = vsyncpa [#allocation5], 0
    // Predicated region
    $region2: #{tpu_custom_call.1} parent=1 // pred_check
      _
    $region3: #{tpu_custom_call.1} parent=1 // pred_check_branch
      %13 = sbr.rel (0) target = $region5
    $region4: #{tpu_custom_call.1} parent=1 // pred_region
      _
    $region5: #{tpu_custom_call.1} parent=1 // pred_fallthru
      _
    // Predicated region
    $region6: #{tpu_custom_call.1} parent=1 // pred_check
      _
    $region7: #{tpu_custom_call.1} parent=1 // pred_check_branch
      %15 = sbr.rel (0) target = $region9
    $region8: #{tpu_custom_call.1} parent=1 // pred_region
      _
    $region9: #{tpu_custom_call.1} parent=1 // pred_fallthru
      _
    // Predicated region
    $region10: #{tpu_custom_call.1} parent=1 // pred_check
      _
    $region11: #{tpu_custom_call.1} parent=1 // pred_check_branch
      %17 = sbr.rel (0) target = $region13
    $region12: #{tpu_custom_call.1} parent=1 // pred_region
      _
    $region13: #{tpu_custom_call.1} parent=1 // pred_fallthru
      _
    // Predicated region
    $region14: #{tpu_custom_call.1} parent=1 // pred_check
      _
    $region15: #{tpu_custom_call.1} parent=1 // pred_check_branch
      %19 = sbr.rel (0) target = $region17
    $region16: #{tpu_custom_call.1} parent=1 // pred_region
      _
    $region17: #{tpu_custom_call.1} parent=1 // pred_fallthru
      _
    // Predicated region
    $region18: #{tpu_custom_call.1} parent=1 // pred_check
      _
    $region19: #{tpu_custom_call.1} parent=1 // pred_check_branch
      %21 = sbr.rel (0) target = $region21
    $region20: #{tpu_custom_call.1} parent=1 // pred_region
      %s23 = ssub.s32 1024, 1024
      %24 = vsyncadd [#allocation4], %s23
      %s25 = sshll.u32 [#allocation3], 4
      %s26 = int_to_ptr.vmem [resolvable:$true] %s25
      %31 = dma.hbm_to_vmem [thread:$0]  %s4, 1024, %s26, [#allocation4], 64, 64, 4
    $region21: #{tpu_custom_call.1} parent=1 // pred_fallthru
      _
    // Predicated region
    $region22: #{tpu_custom_call.1} parent=1 // pred_check
      _
    $region23: #{tpu_custom_call.1} parent=1 // pred_check_branch
      %33 = sbr.rel (0) target = $region25
    $region24: #{tpu_custom_call.1} parent=1 // pred_region
      %34 = dma.done [#allocation4], 1024
    $region25: #{tpu_custom_call.1} parent=1 // pred_fallthru
      _
    %p36 = scmp.eq.s32.totalorder 0, 0
    // Predicated region
    $region26: #{tpu_custom_call.1} parent=1 // pred_check
      %p37 = pneg %p36
    $region27: #{tpu_custom_call.1} parent=1 // pred_check_branch
      %39 = sbr.rel (%p37) target = $region29
    $region28: #{tpu_custom_call.1} parent=1 // pred_region
      %40 = vst [vmem:[#allocation2] sm:$0xff] 0.0
      %41 = vst [vmem:[#allocation2 + $0x8] sm:$0xff] 0.0
      %42 = vst [vmem:[#allocation2 + $0x10] sm:$0xff] 0.0
      %43 = vst [vmem:[#allocation2 + $0x18] sm:$0xff] 0.0
      %44 = vst [vmem:[#allocation2 + $0x20] sm:$0xff] 0.0
      %45 = vst [vmem:[#allocation2 + $0x28] sm:$0xff] 0.0
      %46 = vst [vmem:[#allocation2 + $0x30] sm:$0xff] 0.0
      %47 = vst [vmem:[#allocation2 + $0x38] sm:$0xff] 0.0
      %48 = vst [vmem:[#allocation2 + $0x40] sm:$0xff] 0.0
      %49 = vst [vmem:[#allocation2 + $0x48] sm:$0xff] 0.0
      %50 = vst [vmem:[#allocation2 + $0x50] sm:$0xff] 0.0
      %51 = vst [vmem:[#allocation2 + $0x58] sm:$0xff] 0.0
      %52 = vst [vmem:[#allocation2 + $0x60] sm:$0xff] 0.0
      %53 = vst [vmem:[#allocation2 + $0x68] sm:$0xff] 0.0
      %54 = vst [vmem:[#allocation2 + $0x70] sm:$0xff] 0.0
      %55 = vst [vmem:[#allocation2 + $0x78] sm:$0xff] 0.0
    $region29: #{tpu_custom_call.1} parent=1 // pred_fallthru
      _
    %s56 = smul.u32 0, 128
    %s57 = sshra.s32 %s56, 3
    %s58 = sand.u32 %s56, 7
    %s59 = smul.addr %s57, 4
    %s60 = scalar_lea.vmem %s1, %s59
    %v61 = vld [vmem:[%s60] sm:$0xf]
    %v62 = vld [vmem:[%s60 + $0x4] sm:$0xf]
    %v63 = vld [vmem:[%s60 + $0x8] sm:$0xf]
    %v64 = vld [vmem:[%s60 + $0xc] sm:$0xf]
    %v65 = vld [vmem:[%s60 + $0x10] sm:$0xf]
    %v66 = vld [vmem:[%s60 + $0x14] sm:$0xf]
    %v67 = vld [vmem:[%s60 + $0x18] sm:$0xf]
    %v68 = vld [vmem:[%s60 + $0x1c] sm:$0xf]
    %v69 = vld [vmem:[%s60 + $0x20] sm:$0xf]
    %v70 = vld [vmem:[%s60 + $0x24] sm:$0xf]
    %v71 = vld [vmem:[%s60 + $0x28] sm:$0xf]
    %v72 = vld [vmem:[%s60 + $0x2c] sm:$0xf]
    %v73 = vld [vmem:[%s60 + $0x30] sm:$0xf]
    %v74 = vld [vmem:[%s60 + $0x34] sm:$0xf]
    %v75 = vld [vmem:[%s60 + $0x38] sm:$0xf]
    %v76 = vld [vmem:[%s60 + $0x3c] sm:$0xf]
    %v77 = vld [vmem:[#allocation2] sm:$0xff]
    %v78 = vld [vmem:[#allocation2 + $0x8] sm:$0xff]
    %v79 = vld [vmem:[#allocation2 + $0x10] sm:$0xff]
    %v80 = vld [vmem:[#allocation2 + $0x18] sm:$0xff]
    %v81 = vld [vmem:[#allocation2 + $0x20] sm:$0xff]
    %v82 = vld [vmem:[#allocation2 + $0x28] sm:$0xff]
    %v83 = vld [vmem:[#allocation2 + $0x30] sm:$0xff]
    %v84 = vld [vmem:[#allocation2 + $0x38] sm:$0xff]
    %v85 = vld [vmem:[#allocation2 + $0x40] sm:$0xff]
    %v86 = vld [vmem:[#allocation2 + $0x48] sm:$0xff]
    %v87 = vld [vmem:[#allocation2 + $0x50] sm:$0xff]
    %v88 = vld [vmem:[#allocation2 + $0x58] sm:$0xff]
    %v89 = vld [vmem:[#allocation2 + $0x60] sm:$0xff]
    %v90 = vld [vmem:[#allocation2 + $0x68] sm:$0xff]
    %v91 = vld [vmem:[#allocation2 + $0x70] sm:$0xff]
    %v92 = vld [vmem:[#allocation2 + $0x78] sm:$0xff]
    %v93 = vld [vmem:[%s0] sm:$0xf]
    %v94 = vld [vmem:[%s0 + $0x4] sm:$0xf]
    %v95 = vld [vmem:[%s0 + $0x8] sm:$0xf]
    %v96 = vld [vmem:[%s0 + $0xc] sm:$0xf]
    %v97 = vld [vmem:[%s0 + $0x10] sm:$0xf]
    %v98 = vld [vmem:[%s0 + $0x14] sm:$0xf]
    %v99 = vld [vmem:[%s0 + $0x18] sm:$0xf]
    %v100 = vld [vmem:[%s0 + $0x1c] sm:$0xf]
    %v101 = vld [vmem:[%s0 + $0x20] sm:$0xf]
    %v102 = vld [vmem:[%s0 + $0x24] sm:$0xf]
    %v103 = vld [vmem:[%s0 + $0x28] sm:$0xf]
    %v104 = vld [vmem:[%s0 + $0x2c] sm:$0xf]
    %v105 = vld [vmem:[%s0 + $0x30] sm:$0xf]
    %v106 = vld [vmem:[%s0 + $0x34] sm:$0xf]
    %v107 = vld [vmem:[%s0 + $0x38] sm:$0xf]
    %v108 = vld [vmem:[%s0 + $0x3c] sm:$0xf]
    %v125 = vunpack.c.l.b16 %v93
    %v126 = vunpack.c.l.b16 %v94
    %v127 = vunpack.c.l.b16 %v95
    %v128 = vunpack.c.l.b16 %v96
    %v129 = vunpack.c.l.b16 %v97
    %v130 = vunpack.c.l.b16 %v98
    %v131 = vunpack.c.l.b16 %v99
    %v132 = vunpack.c.l.b16 %v100
    %v133 = vunpack.c.l.b16 %v101
    %v134 = vunpack.c.l.b16 %v102
    %v135 = vunpack.c.l.b16 %v103
    %v136 = vunpack.c.l.b16 %v104
    %v137 = vunpack.c.l.b16 %v105
    %v138 = vunpack.c.l.b16 %v106
    %v139 = vunpack.c.l.b16 %v107
    %v140 = vunpack.c.l.b16 %v108
    %v141 = vpack.c.b16 %v126, %v125
    %v142 = vpack.c.b16 %v128, %v127
    %v143 = vpack.c.b16 %v130, %v129
    %v144 = vpack.c.b16 %v132, %v131
    %v145 = vpack.c.b16 %v134, %v133
    %v146 = vpack.c.b16 %v136, %v135
    %v147 = vpack.c.b16 %v138, %v137
    %v148 = vpack.c.b16 %v140, %v139
    %v173 = vunpack.c.l.b16 %v61
    %v174 = vunpack.c.l.b16 %v62
    %v175 = vunpack.c.l.b16 %v63
    %v176 = vunpack.c.l.b16 %v64
    %v177 = vunpack.c.l.b16 %v65
    %v178 = vunpack.c.l.b16 %v66
    %v179 = vunpack.c.l.b16 %v67
    %v180 = vunpack.c.l.b16 %v68
    %v181 = vunpack.c.l.b16 %v69
    %v182 = vunpack.c.l.b16 %v70
    %v183 = vunpack.c.l.b16 %v71
    %v184 = vunpack.c.l.b16 %v72
    %v185 = vunpack.c.l.b16 %v73
    %v186 = vunpack.c.l.b16 %v74
    %v187 = vunpack.c.l.b16 %v75
    %v188 = vunpack.c.l.b16 %v76
    %v189 = vpack.c.b16 %v174, %v173
    %v190 = vpack.c.b16 %v176, %v175
    %v191 = vpack.c.b16 %v178, %v177
    %v192 = vpack.c.b16 %v180, %v179
    %v193 = vpack.c.b16 %v182, %v181
    %v194 = vpack.c.b16 %v184, %v183
    %v195 = vpack.c.b16 %v186, %v185
    %v196 = vpack.c.b16 %v188, %v187
    %205 = vmatprep.subr.bf16.mxu0 0
    %206 = vmatpush1.bf16.msra.mxu0 %v189
    %207 = vmatprep.subr.bf16.mxu0 0
    %208 = vmatpush1.bf16.msra.mxu0 %v190
    %209 = vmatprep.subr.bf16.mxu0 0
    %210 = vmatpush1.bf16.msra.mxu0 %v191
    %211 = vmatprep.subr.bf16.mxu0 0
    %212 = vmatpush1.bf16.msra.mxu0 %v192
    %213 = vmatprep.subr.bf16.mxu0 0
    %214 = vmatpush1.bf16.msra.mxu0 %v193
    %215 = vmatprep.subr.bf16.mxu0 0
    %216 = vmatpush1.bf16.msra.mxu0 %v194
    %217 = vmatprep.subr.bf16.mxu0 0
    %218 = vmatpush1.bf16.msra.mxu0 %v195
    %219 = vmatprep.subr.bf16.mxu0 0
    %220 = vmatpush1.bf16.msra.mxu0 %v196
    %221 = vmatprep.subr.bf16.mxu0 0
    %222 = vmatpush1.bf16.msra.mxu0 0
    %223 = vmatprep.subr.bf16.mxu0 0
    %224 = vmatpush1.bf16.msra.mxu0 0
    %225 = vmatprep.subr.bf16.mxu0 0
    %226 = vmatpush1.bf16.msra.mxu0 0
    %227 = vmatprep.subr.bf16.mxu0 0
    %228 = vmatpush1.bf16.msra.mxu0 0
    %229 = vmatprep.subr.bf16.mxu0 0
    %230 = vmatpush1.bf16.msra.mxu0 0
    %231 = vmatprep.subr.bf16.mxu0 0
    %232 = vmatpush1.bf16.msra.mxu0 0
    %233 = vmatprep.subr.bf16.mxu0 0
    %234 = vmatpush1.bf16.msra.mxu0 0
    %235 = vmatprep.subr.bf16.mxu0 0
    %236 = vmatpush1.bf16.msra.mxu0 0
    %237 = vmatprep.mubr.bf16.mxu0 0
    %238 = vmatmul.mubr.bf16.gmra.mrb[0].mxu0 %v141
    %v239 = vpop.f32.mrb[0].mxu0
    %v240 = vadd.f32 0.0, %v239
    %v241 = vpop.f32.mrb[0].mxu0
    %v242 = vpop.f32.mrb[0].mxu0
    %v243 = vadd.f32 0.0, %v242
    %v244 = vpop.f32.mrb[0].mxu0
    %245 = vmatprep.mubr.bf16.mxu0 0
    %246 = vmatmul.mubr.bf16.gmra.mrb[0].mxu0 %v142
    %v247 = vpop.f32.mrb[0].mxu0
    %v248 = vadd.f32 0.0, %v247
    %v249 = vpop.f32.mrb[0].mxu0
    %v250 = vpop.f32.mrb[0].mxu0
    %v251 = vadd.f32 0.0, %v250
    %v252 = vpop.f32.mrb[0].mxu0
    %253 = vmatprep.mubr.bf16.mxu0 0
    %254 = vmatmul.mubr.bf16.gmra.mrb[0].mxu0 %v143
    %v255 = vpop.f32.mrb[0].mxu0
    %v256 = vadd.f32 0.0, %v255
    %v257 = vpop.f32.mrb[0].mxu0
    %v258 = vpop.f32.mrb[0].mxu0
    %v259 = vadd.f32 0.0, %v258
    %v260 = vpop.f32.mrb[0].mxu0
    %261 = vmatprep.mubr.bf16.mxu0 0
    %262 = vmatmul.mubr.bf16.gmra.mrb[0].mxu0 %v144
    %v263 = vpop.f32.mrb[0].mxu0
    %v264 = vadd.f32 0.0, %v263
    %v265 = vpop.f32.mrb[0].mxu0
    %v266 = vpop.f32.mrb[0].mxu0
    %v267 = vadd.f32 0.0, %v266
    %v268 = vpop.f32.mrb[0].mxu0
    %269 = vmatprep.mubr.bf16.mxu0 0
    %270 = vmatmul.mubr.bf16.gmra.mrb[0].mxu0 %v145
    %v271 = vpop.f32.mrb[0].mxu0
    %v272 = vadd.f32 0.0, %v271
    %v273 = vpop.f32.mrb[0].mxu0
    %v274 = vpop.f32.mrb[0].mxu0
    %v275 = vadd.f32 0.0, %v274
    %v276 = vpop.f32.mrb[0].mxu0
    %277 = vmatprep.mubr.bf16.mxu0 0
    %278 = vmatmul.mubr.bf16.gmra.mrb[0].mxu0 %v146
    %v279 = vpop.f32.mrb[0].mxu0
    %v280 = vadd.f32 0.0, %v279
    %v281 = vpop.f32.mrb[0].mxu0
    %v282 = vpop.f32.mrb[0].mxu0
    %v283 = vadd.f32 0.0, %v282
    %v284 = vpop.f32.mrb[0].mxu0
    %285 = vmatprep.mubr.bf16.mxu0 0
    %286 = vmatmul.mubr.bf16.gmra.mrb[0].mxu0 %v147
    %v287 = vpop.f32.mrb[0].mxu0
    %v288 = vadd.f32 0.0, %v287
    %v289 = vpop.f32.mrb[0].mxu0
    %v290 = vpop.f32.mrb[0].mxu0
    %v291 = vadd.f32 0.0, %v290
    %v292 = vpop.f32.mrb[0].mxu0
    %293 = vmatprep.mubr.bf16.mxu0 0
    %294 = vmatmul.mubr.bf16.gmra.mrb[0].mxu0 %v148
    %v295 = vpop.f32.mrb[0].mxu0
    %v296 = vadd.f32 0.0, %v295
    %v297 = vpop.f32.mrb[0].mxu0
    %v298 = vpop.f32.mrb[0].mxu0
    %v299 = vadd.f32 0.0, %v298
    %v300 = vpop.f32.mrb[0].mxu0
    %301 = vdwg.mxu0
    %v302 = vadd.f32 %v77, %v240
    %v303 = vadd.f32 %v78, %v243
    %v304 = vadd.f32 %v79, %v248
    %v305 = vadd.f32 %v80, %v251
    %v306 = vadd.f32 %v81, %v256
    %v307 = vadd.f32 %v82, %v259
    %v308 = vadd.f32 %v83, %v264
    %v309 = vadd.f32 %v84, %v267
    %v310 = vadd.f32 %v85, %v272
    %v311 = vadd.f32 %v86, %v275
    %v312 = vadd.f32 %v87, %v280
    %v313 = vadd.f32 %v88, %v283
    %v314 = vadd.f32 %v89, %v288
    %v315 = vadd.f32 %v90, %v291
    %v316 = vadd.f32 %v91, %v296
    %v317 = vadd.f32 %v92, %v299
    %318 = vst [vmem:[#allocation2] sm:$0xff] %v302
    %319 = vst [vmem:[#allocation2 + $0x8] sm:$0xff] %v303
    %320 = vst [vmem:[#allocation2 + $0x10] sm:$0xff] %v304
    %321 = vst [vmem:[#allocation2 + $0x18] sm:$0xff] %v305
    %322 = vst [vmem:[#allocation2 + $0x20] sm:$0xff] %v306
    %323 = vst [vmem:[#allocation2 + $0x28] sm:$0xff] %v307
    %324 = vst [vmem:[#allocation2 + $0x30] sm:$0xff] %v308
    %325 = vst [vmem:[#allocation2 + $0x38] sm:$0xff] %v309
    %326 = vst [vmem:[#allocation2 + $0x40] sm:$0xff] %v310
    %327 = vst [vmem:[#allocation2 + $0x48] sm:$0xff] %v311
    %328 = vst [vmem:[#allocation2 + $0x50] sm:$0xff] %v312
    %329 = vst [vmem:[#allocation2 + $0x58] sm:$0xff] %v313
    %330 = vst [vmem:[#allocation2 + $0x60] sm:$0xff] %v314
    %331 = vst [vmem:[#allocation2 + $0x68] sm:$0xff] %v315
    %332 = vst [vmem:[#allocation2 + $0x70] sm:$0xff] %v316
    %333 = vst [vmem:[#allocation2 + $0x78] sm:$0xff] %v317
    // Predicated region
    $region30: #{tpu_custom_call.1} parent=1 // pred_check
      %p334 = pneg %p36
    $region31: #{tpu_custom_call.1} parent=1 // pred_check_branch
      %336 = sbr.rel (%p334) target = $region33
    $region32: #{tpu_custom_call.1} parent=1 // pred_region
      %v337 = vld [vmem:[%s3] sm:$0xff]
      %v338 = vld [vmem:[%s3 + $0x8] sm:$0xff]
      %v339 = vld [vmem:[%s3 + $0x10] sm:$0xff]
      %v340 = vld [vmem:[%s3 + $0x18] sm:$0xff]
      %v341 = vld [vmem:[%s3 + $0x20] sm:$0xff]
      %v342 = vld [vmem:[%s3 + $0x28] sm:$0xff]
      %v343 = vld [vmem:[%s3 + $0x30] sm:$0xff]
      %v344 = vld [vmem:[%s3 + $0x38] sm:$0xff]
      %v345 = vld [vmem:[%s3 + $0x40] sm:$0xff]
      %v346 = vld [vmem:[%s3 + $0x48] sm:$0xff]
      %v347 = vld [vmem:[%s3 + $0x50] sm:$0xff]
      %v348 = vld [vmem:[%s3 + $0x58] sm:$0xff]
      %v349 = vld [vmem:[%s3 + $0x60] sm:$0xff]
      %v350 = vld [vmem:[%s3 + $0x68] sm:$0xff]
      %v351 = vld [vmem:[%s3 + $0x70] sm:$0xff]
      %v352 = vld [vmem:[%s3 + $0x78] sm:$0xff]
      %v353 = vld [vmem:[#allocation2] sm:$0xff]
      %v354 = vld [vmem:[#allocation2 + $0x8] sm:$0xff]
      %v355 = vld [vmem:[#allocation2 + $0x10] sm:$0xff]
      %v356 = vld [vmem:[#allocation2 + $0x18] sm:$0xff]
      %v357 = vld [vmem:[#allocation2 + $0x20] sm:$0xff]
      %v358 = vld [vmem:[#allocation2 + $0x28] sm:$0xff]
      %v359 = vld [vmem:[#allocation2 + $0x30] sm:$0xff]
      %v360 = vld [vmem:[#allocation2 + $0x38] sm:$0xff]
      %v361 = vld [vmem:[#allocation2 + $0x40] sm:$0xff]
      %v362 = vld [vmem:[#allocation2 + $0x48] sm:$0xff]
      %v363 = vld [vmem:[#allocation2 + $0x50] sm:$0xff]
      %v364 = vld [vmem:[#allocation2 + $0x58] sm:$0xff]
      %v365 = vld [vmem:[#allocation2 + $0x60] sm:$0xff]
      %v366 = vld [vmem:[#allocation2 + $0x68] sm:$0xff]
      %v367 = vld [vmem:[#allocation2 + $0x70] sm:$0xff]
      %v368 = vld [vmem:[#allocation2 + $0x78] sm:$0xff]
      %370 = vset.pattern.permute.xlu0 0
      %371 = vperm.xlu0 %370, %v337
      %v372 = vpop.permute.xlu0 %371
      %375 = vset.pattern.permute.xlu0 0
      %376 = vperm.xlu0 %375, %v338
      %v377 = vpop.permute.xlu0 %376
      %380 = vset.pattern.permute.xlu0 0
      %381 = vperm.xlu0 %380, %v339
      %v382 = vpop.permute.xlu0 %381
      %385 = vset.pattern.permute.xlu0 0
      %386 = vperm.xlu0 %385, %v340
      %v387 = vpop.permute.xlu0 %386
      %390 = vset.pattern.permute.xlu0 0
      %391 = vperm.xlu0 %390, %v341
      %v392 = vpop.permute.xlu0 %391
      %395 = vset.pattern.permute.xlu0 0
      %396 = vperm.xlu0 %395, %v342
      %v397 = vpop.permute.xlu0 %396
      %400 = vset.pattern.permute.xlu0 0
      %401 = vperm.xlu0 %400, %v343
      %v402 = vpop.permute.xlu0 %401
      %405 = vset.pattern.permute.xlu0 0
      %406 = vperm.xlu0 %405, %v344
      %v407 = vpop.permute.xlu0 %406
      %410 = vset.pattern.permute.xlu0 0
      %411 = vperm.xlu0 %410, %v345
      %v412 = vpop.permute.xlu0 %411
      %415 = vset.pattern.permute.xlu0 0
      %416 = vperm.xlu0 %415, %v346
      %v417 = vpop.permute.xlu0 %416
      %420 = vset.pattern.permute.xlu0 0
      %421 = vperm.xlu0 %420, %v347
      %v422 = vpop.permute.xlu0 %421
      %425 = vset.pattern.permute.xlu0 0
      %426 = vperm.xlu0 %425, %v348
      %v427 = vpop.permute.xlu0 %426
      %430 = vset.pattern.permute.xlu0 0
      %431 = vperm.xlu0 %430, %v349
      %v432 = vpop.permute.xlu0 %431
      %435 = vset.pattern.permute.xlu0 0
      %436 = vperm.xlu0 %435, %v350
      %v437 = vpop.permute.xlu0 %436
      %440 = vset.pattern.permute.xlu0 0
      %441 = vperm.xlu0 %440, %v351
      %v442 = vpop.permute.xlu0 %441
      %445 = vset.pattern.permute.xlu0 0
      %446 = vperm.xlu0 %445, %v352
      %v447 = vpop.permute.xlu0 %446
      %v449 = vmul.f32 %v372, %v353
      %v450 = vmul.f32 %v377, %v354
      %v451 = vmul.f32 %v382, %v355
      %v452 = vmul.f32 %v387, %v356
      %v453 = vmul.f32 %v392, %v357
      %v454 = vmul.f32 %v397, %v358
      %v455 = vmul.f32 %v402, %v359
      %v456 = vmul.f32 %v407, %v360
      %v457 = vmul.f32 %v412, %v361
      %v458 = vmul.f32 %v417, %v362
      %v459 = vmul.f32 %v422, %v363
      %v460 = vmul.f32 %v427, %v364
      %v461 = vmul.f32 %v432, %v365
      %v462 = vmul.f32 %v437, %v366
      %v463 = vmul.f32 %v442, %v367
      %v464 = vmul.f32 %v447, %v368
      %v465 = vld [vmem:[%s2] sm:$0x1]
      %v467 = vlaneseq
      %v468 = vshrl.u32 %v467, 7
      %v469 = vsub.s32 0, %v468
      %v470 = vrot.slane %v465, %v469
      %v472 = vadd.f32 %v449, %v470
      %v473 = vadd.f32 %v450, %v470
      %v474 = vadd.f32 %v451, %v470
      %v475 = vadd.f32 %v452, %v470
      %v476 = vadd.f32 %v453, %v470
      %v477 = vadd.f32 %v454, %v470
      %v478 = vadd.f32 %v455, %v470
      %v479 = vadd.f32 %v456, %v470
      %v480 = vadd.f32 %v457, %v470
      %v481 = vadd.f32 %v458, %v470
      %v482 = vadd.f32 %v459, %v470
      %v483 = vadd.f32 %v460, %v470
      %v484 = vadd.f32 %v461, %v470
      %v485 = vadd.f32 %v462, %v470
      %v486 = vadd.f32 %v463, %v470
      %v487 = vadd.f32 %v464, %v470
      %v488 = vmax.f32 %v472, 0.0
      %v489 = vmax.f32 %v473, 0.0
      %v490 = vmax.f32 %v474, 0.0
      %v491 = vmax.f32 %v475, 0.0
      %v492 = vmax.f32 %v476, 0.0
      %v493 = vmax.f32 %v477, 0.0
      %v494 = vmax.f32 %v478, 0.0
      %v495 = vmax.f32 %v479, 0.0
      %v496 = vmax.f32 %v480, 0.0
      %v497 = vmax.f32 %v481, 0.0
      %v498 = vmax.f32 %v482, 0.0
      %v499 = vmax.f32 %v483, 0.0
      %v500 = vmax.f32 %v484, 0.0
      %v501 = vmax.f32 %v485, 0.0
      %v502 = vmax.f32 %v486, 0.0
      %v503 = vmax.f32 %v487, 0.0
      %v504 = vmul.f32 %v372, %v488
      %v505 = vmul.f32 %v377, %v489
      %v506 = vmul.f32 %v382, %v490
      %v507 = vmul.f32 %v387, %v491
      %v508 = vmul.f32 %v392, %v492
      %v509 = vmul.f32 %v397, %v493
      %v510 = vmul.f32 %v402, %v494
      %v511 = vmul.f32 %v407, %v495
      %v512 = vmul.f32 %v412, %v496
      %v513 = vmul.f32 %v417, %v497
      %v514 = vmul.f32 %v422, %v498
      %v515 = vmul.f32 %v427, %v499
      %v516 = vmul.f32 %v432, %v500
      %v517 = vmul.f32 %v437, %v501
      %v518 = vmul.f32 %v442, %v502
      %v519 = vmul.f32 %v447, %v503
      %v520 = vpack.c.bf16 %v505, %v504
      %v521 = vpack.c.bf16 %v507, %v506
      %v522 = vpack.c.bf16 %v509, %v508
      %v523 = vpack.c.bf16 %v511, %v510
      %v524 = vpack.c.bf16 %v513, %v512
      %v525 = vpack.c.bf16 %v515, %v514
      %v526 = vpack.c.bf16 %v517, %v516
      %v527 = vpack.c.bf16 %v519, %v518
      %v528 = vld [vmem:[#allocation3] sm:$0xf]
      %v529 = vld [vmem:[#allocation3 + $0x4] sm:$0xf]
      %v530 = vld [vmem:[#allocation3 + $0x8] sm:$0xf]
      %v531 = vld [vmem:[#allocation3 + $0xc] sm:$0xf]
      %v532 = vld [vmem:[#allocation3 + $0x10] sm:$0xf]
      %v533 = vld [vmem:[#allocation3 + $0x14] sm:$0xf]
      %v534 = vld [vmem:[#allocation3 + $0x18] sm:$0xf]
      %v535 = vld [vmem:[#allocation3 + $0x1c] sm:$0xf]
      %v536 = vld [vmem:[#allocation3 + $0x20] sm:$0xf]
      %v537 = vld [vmem:[#allocation3 + $0x24] sm:$0xf]
      %v538 = vld [vmem:[#allocation3 + $0x28] sm:$0xf]
      %v539 = vld [vmem:[#allocation3 + $0x2c] sm:$0xf]
      %v540 = vld [vmem:[#allocation3 + $0x30] sm:$0xf]
      %v541 = vld [vmem:[#allocation3 + $0x34] sm:$0xf]
      %v542 = vld [vmem:[#allocation3 + $0x38] sm:$0xf]
      %v543 = vld [vmem:[#allocation3 + $0x3c] sm:$0xf]
      %v560 = vunpack.c.l.b16 %v528
      %v561 = vunpack.c.l.b16 %v529
      %v562 = vunpack.c.l.b16 %v530
      %v563 = vunpack.c.l.b16 %v531
      %v564 = vunpack.c.l.b16 %v532
      %v565 = vunpack.c.l.b16 %v533
      %v566 = vunpack.c.l.b16 %v534
      %v567 = vunpack.c.l.b16 %v535
      %v568 = vunpack.c.l.b16 %v536
      %v569 = vunpack.c.l.b16 %v537
      %v570 = vunpack.c.l.b16 %v538
      %v571 = vunpack.c.l.b16 %v539
      %v572 = vunpack.c.l.b16 %v540
      %v573 = vunpack.c.l.b16 %v541
      %v574 = vunpack.c.l.b16 %v542
      %v575 = vunpack.c.l.b16 %v543
      %v576 = vpack.c.b16 %v561, %v560
      %v577 = vpack.c.b16 %v563, %v562
      %v578 = vpack.c.b16 %v565, %v564
      %v579 = vpack.c.b16 %v567, %v566
      %v580 = vpack.c.b16 %v569, %v568
      %v581 = vpack.c.b16 %v571, %v570
      %v582 = vpack.c.b16 %v573, %v572
      %v583 = vpack.c.b16 %v575, %v574
      %592 = vmatprep.subr.bf16.mxu0 0
      %593 = vmatpush1.bf16.msra.mxu0 %v576
      %594 = vmatprep.subr.bf16.mxu0 0
      %595 = vmatpush1.bf16.msra.mxu0 %v577
      %596 = vmatprep.subr.bf16.mxu0 0
      %597 = vmatpush1.bf16.msra.mxu0 %v578
      %598 = vmatprep.subr.bf16.mxu0 0
      %599 = vmatpush1.bf16.msra.mxu0 %v579
      %600 = vmatprep.subr.bf16.mxu0 0
      %601 = vmatpush1.bf16.msra.mxu0 %v580
      %602 = vmatprep.subr.bf16.mxu0 0
      %603 = vmatpush1.bf16.msra.mxu0 %v581
      %604 = vmatprep.subr.bf16.mxu0 0
      %605 = vmatpush1.bf16.msra.mxu0 %v582
      %606 = vmatprep.subr.bf16.mxu0 0
      %607 = vmatpush1.bf16.msra.mxu0 %v583
      %608 = vmatprep.subr.bf16.mxu0 0
      %609 = vmatpush1.bf16.msra.mxu0 0
      %610 = vmatprep.subr.bf16.mxu0 0
      %611 = vmatpush1.bf16.msra.mxu0 0
      %612 = vmatprep.subr.bf16.mxu0 0
      %613 = vmatpush1.bf16.msra.mxu0 0
      %614 = vmatprep.subr.bf16.mxu0 0
      %615 = vmatpush1.bf16.msra.mxu0 0
      %616 = vmatprep.subr.bf16.mxu0 0
      %617 = vmatpush1.bf16.msra.mxu0 0
      %618 = vmatprep.subr.bf16.mxu0 0
      %619 = vmatpush1.bf16.msra.mxu0 0
      %620 = vmatprep.subr.bf16.mxu0 0
      %621 = vmatpush1.bf16.msra.mxu0 0
      %622 = vmatprep.subr.bf16.mxu0 0
      %623 = vmatpush1.bf16.msra.mxu0 0
      %624 = vmatprep.mubr.bf16.mxu0 0
      %625 = vmatmul.mubr.bf16.gmra.mrb[0].mxu0 %v520
      %v626 = vpop.f32.mrb[0].mxu0
      %v627 = vadd.f32 0.0, %v626
      %v628 = vpop.f32.mrb[0].mxu0
      %v629 = vpop.f32.mrb[0].mxu0
      %v630 = vadd.f32 0.0, %v629
      %v631 = vpop.f32.mrb[0].mxu0
      %632 = vmatprep.mubr.bf16.mxu0 0
      %633 = vmatmul.mubr.bf16.gmra.mrb[0].mxu0 %v521
      %v634 = vpop.f32.mrb[0].mxu0
      %v635 = vadd.f32 0.0, %v634
      %v636 = vpop.f32.mrb[0].mxu0
      %v637 = vpop.f32.mrb[0].mxu0
      %v638 = vadd.f32 0.0, %v637
      %v639 = vpop.f32.mrb[0].mxu0
      %640 = vmatprep.mubr.bf16.mxu0 0
      %641 = vmatmul.mubr.bf16.gmra.mrb[0].mxu0 %v522
      %v642 = vpop.f32.mrb[0].mxu0
      %v643 = vadd.f32 0.0, %v642
      %v644 = vpop.f32.mrb[0].mxu0
      %v645 = vpop.f32.mrb[0].mxu0
      %v646 = vadd.f32 0.0, %v645
      %v647 = vpop.f32.mrb[0].mxu0
      %648 = vmatprep.mubr.bf16.mxu0 0
      %649 = vmatmul.mubr.bf16.gmra.mrb[0].mxu0 %v523
      %v650 = vpop.f32.mrb[0].mxu0
      %v651 = vadd.f32 0.0, %v650
      %v652 = vpop.f32.mrb[0].mxu0
      %v653 = vpop.f32.mrb[0].mxu0
      %v654 = vadd.f32 0.0, %v653
      %v655 = vpop.f32.mrb[0].mxu0
      %656 = vmatprep.mubr.bf16.mxu0 0
      %657 = vmatmul.mubr.bf16.gmra.mrb[0].mxu0 %v524
      %v658 = vpop.f32.mrb[0].mxu0
      %v659 = vadd.f32 0.0, %v658
      %v660 = vpop.f32.mrb[0].mxu0
      %v661 = vpop.f32.mrb[0].mxu0
      %v662 = vadd.f32 0.0, %v661
      %v663 = vpop.f32.mrb[0].mxu0
      %664 = vmatprep.mubr.bf16.mxu0 0
      %665 = vmatmul.mubr.bf16.gmra.mrb[0].mxu0 %v525
      %v666 = vpop.f32.mrb[0].mxu0
      %v667 = vadd.f32 0.0, %v666
      %v668 = vpop.f32.mrb[0].mxu0
      %v669 = vpop.f32.mrb[0].mxu0
      %v670 = vadd.f32 0.0, %v669
      %v671 = vpop.f32.mrb[0].mxu0
      %672 = vmatprep.mubr.bf16.mxu0 0
      %673 = vmatmul.mubr.bf16.gmra.mrb[0].mxu0 %v526
      %v674 = vpop.f32.mrb[0].mxu0
      %v675 = vadd.f32 0.0, %v674
      %v676 = vpop.f32.mrb[0].mxu0
      %v677 = vpop.f32.mrb[0].mxu0
      %v678 = vadd.f32 0.0, %v677
      %v679 = vpop.f32.mrb[0].mxu0
      %680 = vmatprep.mubr.bf16.mxu0 0
      %681 = vmatmul.mubr.bf16.gmra.mrb[0].mxu0 %v527
      %v682 = vpop.f32.mrb[0].mxu0
      %v683 = vadd.f32 0.0, %v682
      %v684 = vpop.f32.mrb[0].mxu0
      %v685 = vpop.f32.mrb[0].mxu0
      %v686 = vadd.f32 0.0, %v685
      %v687 = vpop.f32.mrb[0].mxu0
      %688 = vdwg.mxu0
      %v689 = vpack.c.bf16 %v630, %v627
      %v690 = vpack.c.bf16 %v638, %v635
      %v691 = vpack.c.bf16 %v646, %v643
      %v692 = vpack.c.bf16 %v654, %v651
      %v693 = vpack.c.bf16 %v662, %v659
      %v694 = vpack.c.bf16 %v670, %v667
      %v695 = vpack.c.bf16 %v678, %v675
      %v696 = vpack.c.bf16 %v686, %v683
      %v705 = vunpack.c.l.b16 %v689
      %v706 = vunpack.c.h.b16 %v689
      %v707 = vunpack.c.l.b16 %v690
      %v708 = vunpack.c.h.b16 %v690
      %v709 = vunpack.c.l.b16 %v691
      %v710 = vunpack.c.h.b16 %v691
      %v711 = vunpack.c.l.b16 %v692
      %v712 = vunpack.c.h.b16 %v692
      %v713 = vunpack.c.l.b16 %v693
      %v714 = vunpack.c.h.b16 %v693
      %v715 = vunpack.c.l.b16 %v694
      %v716 = vunpack.c.h.b16 %v694
      %v717 = vunpack.c.l.b16 %v695
      %v718 = vunpack.c.h.b16 %v695
      %v719 = vunpack.c.l.b16 %v696
      %v720 = vunpack.c.h.b16 %v696
      %v721 = vpack.c.b16 %v705, %v705
      %v722 = vpack.c.b16 %v706, %v706
      %v723 = vpack.c.b16 %v707, %v707
      %v724 = vpack.c.b16 %v708, %v708
      %v725 = vpack.c.b16 %v709, %v709
      %v726 = vpack.c.b16 %v710, %v710
      %v727 = vpack.c.b16 %v711, %v711
      %v728 = vpack.c.b16 %v712, %v712
      %v729 = vpack.c.b16 %v713, %v713
      %v730 = vpack.c.b16 %v714, %v714
      %v731 = vpack.c.b16 %v715, %v715
      %v732 = vpack.c.b16 %v716, %v716
      %v733 = vpack.c.b16 %v717, %v717
      %v734 = vpack.c.b16 %v718, %v718
      %v735 = vpack.c.b16 %v719, %v719
      %v736 = vpack.c.b16 %v720, %v720
      %753 = vst [vmem:[#allocation6] sm:$0xf] %v721
      %754 = vst [vmem:[#allocation6 + $0x4] sm:$0xf] %v722
      %755 = vst [vmem:[#allocation6 + $0x8] sm:$0xf] %v723
      %756 = vst [vmem:[#allocation6 + $0xc] sm:$0xf] %v724
      %757 = vst [vmem:[#allocation6 + $0x10] sm:$0xf] %v725
      %758 = vst [vmem:[#allocation6 + $0x14] sm:$0xf] %v726
      %759 = vst [vmem:[#allocation6 + $0x18] sm:$0xf] %v727
      %760 = vst [vmem:[#allocation6 + $0x1c] sm:$0xf] %v728
      %761 = vst [vmem:[#allocation6 + $0x20] sm:$0xf] %v729
      %762 = vst [vmem:[#allocation6 + $0x24] sm:$0xf] %v730
      %763 = vst [vmem:[#allocation6 + $0x28] sm:$0xf] %v731
      %764 = vst [vmem:[#allocation6 + $0x2c] sm:$0xf] %v732
      %765 = vst [vmem:[#allocation6 + $0x30] sm:$0xf] %v733
      %766 = vst [vmem:[#allocation6 + $0x34] sm:$0xf] %v734
      %767 = vst [vmem:[#allocation6 + $0x38] sm:$0xf] %v735
      %768 = vst [vmem:[#allocation6 + $0x3c] sm:$0xf] %v736
    $region33: #{tpu_custom_call.1} parent=1 // pred_fallthru
      _
    // Predicated region
    $region34: #{tpu_custom_call.1} parent=1 // pred_check
      _
    $region35: #{tpu_custom_call.1} parent=1 // pred_check_branch
      %770 = sbr.rel (0) target = $region37
    $region36: #{tpu_custom_call.1} parent=1 // pred_region
      %s772 = ssub.s32 1024, 1024
      %773 = vsyncadd [#allocation5], %s772
      %s774 = sshll.u32 [#allocation6], 4
      %s775 = int_to_ptr.vmem [resolvable:$true] %s774
      %780 = dma.vmem_to_hbm [thread:$0]  %s775, 1024, %s5, [#allocation5], 64, 64, 4
    $region37: #{tpu_custom_call.1} parent=1 // pred_fallthru
      _
    // Predicated region
    $region38: #{tpu_custom_call.1} parent=1 // pred_check
      _
    $region39: #{tpu_custom_call.1} parent=1 // pred_check_branch
      %782 = sbr.rel (0) target = $region41
    $region40: #{tpu_custom_call.1} parent=1 // pred_region
      %783 = dma.done [#allocation5], 1024
    $region41: #{tpu_custom_call.1} parent=1 // pred_fallthru
      _
    %784 = vsyncpa [#allocation4], 1
    %785 = vsyncpa [#allocation5], 1

</llo_original>
